<compile_context>
chip_gen: v7x
topology: tpu7x:2x2x1
jax: 0.10.0
libtpu: 0.0.40
codegen_flags: <defaults>
</compile_context>

<pallas_src>
import jax
import jax.numpy as jnp
from jax import lax
from jax.experimental import pallas as pl
from jax.experimental.pallas import tpu as pltpu

# ---- scheduler constants (ConsistencyModelScheduler defaults) ----
T_STEPS = 18 - 1
EPS = 1e-07
SIGMA_DATA = 0.5


def _cm_kernel(x_ref, w1_ref, bias1_ref, w2_ref, b2_ref, cskip_ref, cout_ref,
               o_ref):
    """Single-step fused consistency-model forward.

    x_ref     : [B*C,   HW]     input (pure reshape of NCHW), HW on lanes
    w1_ref    : [B*HID, B*C]    block-diagonal W1^T (one block per batch)
    bias1_ref : [B*HID, 1]      conditioned bias  b1 + t_b * te
    w2_ref    : [B*C,   B*HID]  block-diagonal W2^T
    b2_ref    : [B*C,   1]
    cskip_ref : [B*C,   1]      per-batch cskip, repeated over channels
    cout_ref  : [B*C,   1]      per-batch cout, repeated over channels
    o_ref     : [B*C,   HW]
    """
    x = x_ref[...]                                            # [BC, HW]

    # Backbone F(x, t): whole batch in one MXU pass per layer.
    h = jnp.dot(w1_ref[...], x,
                preferred_element_type=jnp.float32) + bias1_ref[...]   # [BH, HW]
    h = h * jax.nn.sigmoid(h)                                 # SiLU (EUP + VPU)
    f = jnp.dot(w2_ref[...], h,
                preferred_element_type=jnp.float32) + b2_ref[...]      # [BC, HW]

    # Consistency-model boundary mix (lane-dense full-ref store).
    o_ref[...] = cskip_ref[...] * x + cout_ref[...] * f


@jax.jit
def consistency_model_forward(x_nchw, t, params):
    """x_nchw: [B, C, H, W] float32; t: [B] int32 (timesteps in [0, T])."""
    B, C, H, W = x_nchw.shape
    HW = H * W
    w1, b1, te, w2, b2 = params                 # [C,HID],[1,HID],[1,HID],[HID,C],[1,C]
    HID = w1.shape[1]

    # NCHW -> [B*C, HW]: a pure reshape, no data movement.
    x = x_nchw.reshape(B * C, HW)

    # Scheduler coefficients for all B (B scalars, trivially cheap here).
    tf = jnp.maximum(t.astype(jnp.float32), EPS * (1.0 + 0.1))
    t_m_eps = tf - EPS
    cskip = (SIGMA_DATA ** 2) / (t_m_eps * t_m_eps + SIGMA_DATA ** 2)          # [B]
    cout = SIGMA_DATA * t_m_eps * lax.rsqrt(
        jnp.maximum(SIGMA_DATA ** 2 + tf * tf, 1e-07))                         # [B]

    # Broadcast scheduler coefficients over channels -> [B*C, 1] VMEM columns.
    cskip_col = jnp.repeat(cskip, C).reshape(B * C, 1)
    cout_col = jnp.repeat(cout, C).reshape(B * C, 1)

    # Fold the per-batch backbone into block-diagonal weights + conditioned bias
    # (tiny: [B*HID, B*C] and [B*C, B*HID]); lets the whole batch run as two
    # plain 2-D matmuls inside the kernel.
    eye_b = jnp.eye(B, dtype=x_nchw.dtype)
    w1bd = jnp.kron(eye_b, jnp.transpose(w1))                 # [B*HID, B*C]
    w2bd = jnp.kron(eye_b, jnp.transpose(w2))                 # [B*C,  B*HID]
    bias1 = (b1 + tf[:, None] * te).reshape(B * HID, 1)       # [B*HID, 1]
    b2col = jnp.tile(b2.reshape(-1), B).reshape(B * C, 1)     # [B*C, 1]

    vmem = pl.BlockSpec(memory_space=pltpu.MemorySpace.VMEM)
    out = pl.pallas_call(
        _cm_kernel,
        out_shape=jax.ShapeDtypeStruct((B * C, HW), jnp.float32),
        in_specs=[vmem] * 7,
        out_specs=vmem,
    )(x, w1bd, bias1, w2bd, b2col, cskip_col, cout_col)

    # [B*C, HW] -> NCHW: pure reshape again.
    return out.reshape(B, C, H, W)


def _reference_forward(x_nchw, t, params):
    """Pure-JAX reference (same math, independent layout) for sanity checking."""
    w1, b1, te, w2, b2 = params
    tf = jnp.maximum(t.astype(jnp.float32), EPS * 1.1)
    cskip = (SIGMA_DATA ** 2) / ((tf - EPS) ** 2 + SIGMA_DATA ** 2)
    cout = SIGMA_DATA * (tf - EPS) * jax.lax.rsqrt(
        jnp.maximum(SIGMA_DATA ** 2 + tf * tf, 1e-07))
    B, C, H, W = x_nchw.shape
    x = jnp.transpose(x_nchw, (0, 2, 3, 1)).reshape(B, H * W, C)
    h = x @ w1 + b1 + tf[:, None, None] * te
    h = h * jax.nn.sigmoid(h)
    f = h @ w2 + b2
    out = cskip[:, None, None] * x + cout[:, None, None] * f
    return jnp.transpose(out.reshape(B, H, W, C), (0, 3, 1, 2))


if __name__ == "__main__":
    B, C, H, W = 2, 4, 16, 16
    HID = 32

    key = jax.random.PRNGKey(0)
    kx, kt, k1, k2, k3 = jax.random.split(key, 5)

    x = jax.random.normal(kx, (B, C, H, W), dtype=jnp.float32)
    t = jax.random.randint(kt, (B,), 0, T_STEPS + 1, dtype=jnp.int32)

    # Deterministic synthetic backbone parameters.
    w1 = jax.random.normal(k1, (C, HID), dtype=jnp.float32) * 0.2
    b1 = jnp.zeros((1, HID), dtype=jnp.float32)
    te = jax.random.normal(k2, (1, HID), dtype=jnp.float32) * 0.1
    w2 = jax.random.normal(k3, (HID, C), dtype=jnp.float32) * 0.2
    b2 = jnp.zeros((1, C), dtype=jnp.float32)
    params = (w1, b1, te, w2, b2)

    out = consistency_model_forward(x, t, params)
    out = jax.block_until_ready(out)

    ref = _reference_forward(x, t, params)
    assert out.shape == (B, C, H, W)
    assert jnp.allclose(out, ref, atol=1e-5, rtol=1e-5), "mismatch vs reference"

    print("KERNEL_OK")
</pallas_src>

<mosaic_0001>
module attributes {stable_mosaic.version = 11 : i64} {
  func.func @_cm_kernel(%arg0: memref<8x256xf32, #tpu.memory_space<vmem>>, %arg1: memref<64x8xf32, #tpu.memory_space<vmem>>, %arg2: memref<64x1xf32, #tpu.memory_space<vmem>>, %arg3: memref<8x64xf32, #tpu.memory_space<vmem>>, %arg4: memref<8x1xf32, #tpu.memory_space<vmem>>, %arg5: memref<8x1xf32, #tpu.memory_space<vmem>>, %arg6: memref<8x1xf32, #tpu.memory_space<vmem>>, %arg7: memref<8x256xf32, #tpu.memory_space<vmem>>) attributes {dimension_semantics = [], scalar_prefetch = 0 : i64, scratch_operands = 0 : i64, tpu.core_type = #tpu.core_type<tc>} {
    %c0 = arith.constant 0 : index
    %c0_0 = arith.constant 0 : index
    %0 = vector.load %arg0[%c0, %c0_0] : memref<8x256xf32, #tpu.memory_space<vmem>>, vector<8x256xf32>
    %c0_1 = arith.constant 0 : index
    %c0_2 = arith.constant 0 : index
    %1 = vector.load %arg1[%c0_1, %c0_2] : memref<64x8xf32, #tpu.memory_space<vmem>>, vector<64x8xf32>
    %cst = arith.constant dense<0.000000e+00> : vector<64x256xf32>
    %2 = tpu.matmul %1, %0, %cst {dimension_numbers = #tpu.dot_dimension_numbers<[1], [0], [0], [1], [0, 0, 1, 1], [], []>} : vector<64x8xf32>, vector<8x256xf32>, vector<64x256xf32> -> vector<64x256xf32>
    %c0_3 = arith.constant 0 : index
    %c0_4 = arith.constant 0 : index
    %3 = vector.load %arg2[%c0_3, %c0_4] : memref<64x1xf32, #tpu.memory_space<vmem>>, vector<64x1xf32>
    %4 = vector.broadcast %3 : vector<64x1xf32> to vector<64x256xf32>
    %5 = arith.addf %2, %4 : vector<64x256xf32>
    %6 = arith.negf %5 : vector<64x256xf32>
    %7 = math.exp %6 : vector<64x256xf32>
    %cst_5 = arith.constant 1.000000e+00 : f32
    %8 = vector.broadcast %cst_5 : f32 to vector<64x256xf32>
    %9 = arith.addf %8, %7 : vector<64x256xf32>
    %10 = arith.divf %8, %9 : vector<64x256xf32>
    %11 = arith.mulf %5, %10 : vector<64x256xf32>
    %c0_6 = arith.constant 0 : index
    %c0_7 = arith.constant 0 : index
    %12 = vector.load %arg3[%c0_6, %c0_7] : memref<8x64xf32, #tpu.memory_space<vmem>>, vector<8x64xf32>
    %cst_8 = arith.constant dense<0.000000e+00> : vector<8x256xf32>
    %13 = tpu.matmul %12, %11, %cst_8 {dimension_numbers = #tpu.dot_dimension_numbers<[1], [0], [0], [1], [0, 0, 1, 1], [], []>} : vector<8x64xf32>, vector<64x256xf32>, vector<8x256xf32> -> vector<8x256xf32>
    %c0_9 = arith.constant 0 : index
    %c0_10 = arith.constant 0 : index
    %14 = vector.load %arg4[%c0_9, %c0_10] : memref<8x1xf32, #tpu.memory_space<vmem>>, vector<8x1xf32>
    %15 = vector.broadcast %14 : vector<8x1xf32> to vector<8x256xf32>
    %16 = arith.addf %13, %15 : vector<8x256xf32>
    %c0_11 = arith.constant 0 : index
    %c0_12 = arith.constant 0 : index
    %17 = vector.load %arg5[%c0_11, %c0_12] : memref<8x1xf32, #tpu.memory_space<vmem>>, vector<8x1xf32>
    %18 = vector.broadcast %17 : vector<8x1xf32> to vector<8x256xf32>
    %19 = arith.mulf %18, %0 : vector<8x256xf32>
    %c0_13 = arith.constant 0 : index
    %c0_14 = arith.constant 0 : index
    %20 = vector.load %arg6[%c0_13, %c0_14] : memref<8x1xf32, #tpu.memory_space<vmem>>, vector<8x1xf32>
    %21 = vector.broadcast %20 : vector<8x1xf32> to vector<8x256xf32>
    %22 = arith.mulf %21, %16 : vector<8x256xf32>
    %23 = arith.addf %19, %22 : vector<8x256xf32>
    %c0_15 = arith.constant 0 : index
    %c0_16 = arith.constant 0 : index
    %24 = vector.load %arg7[%c0_15, %c0_16] : memref<8x256xf32, #tpu.memory_space<vmem>>, vector<8x256xf32>
    tpu.vector_store %arg7[%c0_15, %c0_16], %23 {strides = array<i32>} : memref<8x256xf32, #tpu.memory_space<vmem>>, vector<8x256xf32>,
    return
  }
}

</mosaic_0001>

<llo_original>
// kernel: tile.6
$region0: #{tile.6}
  #allocation0 [shape = 's32[1]{0}', space=sflag, size = 0x4, scoped, tag = 'scoped memory for tile.6']
  %s0 = inlined_call_operand.vmem [shape: f32[4], index: 0, kind: input, shape index: {}]
  %s1 = inlined_call_operand.vmem [shape: f32[2,4], index: 1, kind: output, shape index: {}]
  // Predicated region
  $region2: #{tile.6} parent=0 // pred_check
    _
  $region3: #{tile.6} parent=0 // pred_check_branch
    %3 = sbr.rel (0) target = $region5
  $region4: #{tile.6} parent=0 // pred_region
    _
  $region5: #{tile.6} parent=0 // pred_fallthru
    _
  %v4 = vld [vmem:[%s0] ss:$0 sm:$0xff]
  %5 = vst [vmem:[%s1] sm:$0x3] %v4

// kernel: consistency_model_forward.1
$region0: #{consistency_model_forward.1}
  #allocation0 [shape = 'u32[]', space=smem, size = 0x4, offset = 0x4, fixed_abs, tag = 'smem constant byte address 0x4 - core index']
  #allocation1 [shape = 'u32[144,128]{1,0:T(1,128)}', space=vmem, size = 0x12000, scoped, tag = 'internal scratch']
  %s0 = inlined_call_operand.vmem [shape: f32[8,256], index: 0, kind: input, shape index: {}]
  %s1 = inlined_call_operand.vmem [shape: f32[64,8], index: 1, kind: input, shape index: {}]
  %s2 = inlined_call_operand.vmem [shape: f32[64,1], index: 2, kind: input, shape index: {}]
  %s3 = inlined_call_operand.vmem [shape: f32[8,64], index: 3, kind: input, shape index: {}]
  %s4 = inlined_call_operand.vmem [shape: f32[8,1], index: 4, kind: input, shape index: {}]
  %s5 = inlined_call_operand.vmem [shape: f32[8,1], index: 5, kind: input, shape index: {}]
  %s6 = inlined_call_operand.vmem [shape: f32[8,1], index: 6, kind: input, shape index: {}]
  %s7 = inlined_call_operand.vmem [shape: f32[8,256], index: 7, kind: output, shape index: {}]
  %s8 = sld [smem:[#allocation0]]
  $region38: #{consistency_model_forward.1} parent=0
    _
  %s10 = ssub.s32 1, %s8
  %s11 = scalar_select 0, %s10, %s8
  // Predicated region
  $region2: #{consistency_model_forward.1} parent=0 // pred_check
    _
  $region3: #{consistency_model_forward.1} parent=0 // pred_check_branch
    %13 = sbr.rel (0) target = $region5
  $region4: #{consistency_model_forward.1} parent=0 // pred_region
    _
  $region5: #{consistency_model_forward.1} parent=0 // pred_fallthru
    _
  // Predicated region
  $region6: #{consistency_model_forward.1} parent=0 // pred_check
    _
  $region7: #{consistency_model_forward.1} parent=0 // pred_check_branch
    %15 = sbr.rel (0) target = $region9
  $region8: #{consistency_model_forward.1} parent=0 // pred_region
    _
  $region9: #{consistency_model_forward.1} parent=0 // pred_fallthru
    _
  // Predicated region
  $region10: #{consistency_model_forward.1} parent=0 // pred_check
    _
  $region11: #{consistency_model_forward.1} parent=0 // pred_check_branch
    %17 = sbr.rel (0) target = $region13
  $region12: #{consistency_model_forward.1} parent=0 // pred_region
    _
  $region13: #{consistency_model_forward.1} parent=0 // pred_fallthru
    _
  // Predicated region
  $region14: #{consistency_model_forward.1} parent=0 // pred_check
    _
  $region15: #{consistency_model_forward.1} parent=0 // pred_check_branch
    %19 = sbr.rel (0) target = $region17
  $region16: #{consistency_model_forward.1} parent=0 // pred_region
    _
  $region17: #{consistency_model_forward.1} parent=0 // pred_fallthru
    _
  // Predicated region
  $region18: #{consistency_model_forward.1} parent=0 // pred_check
    _
  $region19: #{consistency_model_forward.1} parent=0 // pred_check_branch
    %21 = sbr.rel (0) target = $region21
  $region20: #{consistency_model_forward.1} parent=0 // pred_region
    _
  $region21: #{consistency_model_forward.1} parent=0 // pred_fallthru
    _
  // Predicated region
  $region22: #{consistency_model_forward.1} parent=0 // pred_check
    _
  $region23: #{consistency_model_forward.1} parent=0 // pred_check_branch
    %23 = sbr.rel (0) target = $region25
  $region24: #{consistency_model_forward.1} parent=0 // pred_region
    _
  $region25: #{consistency_model_forward.1} parent=0 // pred_fallthru
    _
  // Predicated region
  $region26: #{consistency_model_forward.1} parent=0 // pred_check
    _
  $region27: #{consistency_model_forward.1} parent=0 // pred_check_branch
    %25 = sbr.rel (0) target = $region29
  $region28: #{consistency_model_forward.1} parent=0 // pred_region
    _
  $region29: #{consistency_model_forward.1} parent=0 // pred_fallthru
    _
  %v26 = vld [vmem:[%s0] sm:$0xff]
  %v27 = vld [vmem:[%s0 + $0x8] sm:$0xff]
  %v28 = vld [vmem:[%s1] sm:$0xff]
  %v29 = vld [vmem:[%s1 + $0x8] sm:$0xff]
  %v30 = vld [vmem:[%s1 + $0x10] sm:$0xff]
  %v31 = vld [vmem:[%s1 + $0x18] sm:$0xff]
  %v32 = vld [vmem:[%s1 + $0x20] sm:$0xff]
  %v33 = vld [vmem:[%s1 + $0x28] sm:$0xff]
  %v34 = vld [vmem:[%s1 + $0x30] sm:$0xff]
  %v35 = vld [vmem:[%s1 + $0x38] sm:$0xff]
  %v36 = vld [vmem:[%s2] sm:$0xff]
  %v37 = vld [vmem:[%s2 + $0x8] sm:$0xff]
  %v38 = vld [vmem:[%s2 + $0x10] sm:$0xff]
  %v39 = vld [vmem:[%s2 + $0x18] sm:$0xff]
  %v40 = vld [vmem:[%s2 + $0x20] sm:$0xff]
  %v41 = vld [vmem:[%s2 + $0x28] sm:$0xff]
  %v42 = vld [vmem:[%s2 + $0x30] sm:$0xff]
  %v43 = vld [vmem:[%s2 + $0x38] sm:$0xff]
  %45 = vset.pattern.permute.xlu0 0
  %46 = vperm.xlu0 %45, %v36
  %v47 = vpop.permute.xlu0 %46
  %50 = vset.pattern.permute.xlu0 0
  %51 = vperm.xlu0 %50, %v37
  %v52 = vpop.permute.xlu0 %51
  %55 = vset.pattern.permute.xlu0 0
  %56 = vperm.xlu0 %55, %v38
  %v57 = vpop.permute.xlu0 %56
  %60 = vset.pattern.permute.xlu0 0
  %61 = vperm.xlu0 %60, %v39
  %v62 = vpop.permute.xlu0 %61
  %65 = vset.pattern.permute.xlu0 0
  %66 = vperm.xlu0 %65, %v40
  %v67 = vpop.permute.xlu0 %66
  %70 = vset.pattern.permute.xlu0 0
  %71 = vperm.xlu0 %70, %v41
  %v72 = vpop.permute.xlu0 %71
  %75 = vset.pattern.permute.xlu0 0
  %76 = vperm.xlu0 %75, %v42
  %v77 = vpop.permute.xlu0 %76
  %80 = vset.pattern.permute.xlu0 0
  %81 = vperm.xlu0 %80, %v43
  %v82 = vpop.permute.xlu0 %81
  %vm84 = vcmask 64512
  %v86 = vsel %vm84, %v28, 0
  %v89 = vsel %vm84, %v29, 0
  %v92 = vsel %vm84, %v30, 0
  %v95 = vsel %vm84, %v31, 0
  %v98 = vsel %vm84, %v32, 0
  %v101 = vsel %vm84, %v33, 0
  %v104 = vsel %vm84, %v34, 0
  %v107 = vsel %vm84, %v35, 0
  %109 = vmatprep.subr.mxu0 %v27
  %110 = vmatpush1.msra.mxu0 %v26
  %111 = vmatprep.subr.mxu0 0.0
  %112 = vmatpush1.msra.mxu0 0.0
  %113 = vmatprep.subr.mxu0 0.0
  %114 = vmatpush1.msra.mxu0 0.0
  %115 = vmatprep.subr.mxu0 0.0
  %116 = vmatpush1.msra.mxu0 0.0
  %117 = vmatprep.subr.mxu0 0.0
  %118 = vmatpush1.msra.mxu0 0.0
  %119 = vmatprep.subr.mxu0 0.0
  %120 = vmatpush1.msra.mxu0 0.0
  %121 = vmatprep.subr.mxu0 0.0
  %122 = vmatpush1.msra.mxu0 0.0
  %123 = vmatprep.subr.mxu0 0.0
  %124 = vmatpush1.msra.mxu0 0.0
  %125 = vmatprep.subr.mxu0 0.0
  %126 = vmatpush1.msra.mxu0 0.0
  %127 = vmatprep.subr.mxu0 0.0
  %128 = vmatpush1.msra.mxu0 0.0
  %129 = vmatprep.subr.mxu0 0.0
  %130 = vmatpush1.msra.mxu0 0.0
  %131 = vmatprep.subr.mxu0 0.0
  %132 = vmatpush1.msra.mxu0 0.0
  %133 = vmatprep.subr.mxu0 0.0
  %134 = vmatpush1.msra.mxu0 0.0
  %135 = vmatprep.subr.mxu0 0.0
  %136 = vmatpush1.msra.mxu0 0.0
  %137 = vmatprep.subr.mxu0 0.0
  %138 = vmatpush1.msra.mxu0 0.0
  %139 = vmatprep.subr.mxu0 0.0
  %140 = vmatpush1.msra.mxu0 0.0
  %141 = vmatprep.subr.mxu0 0.0
  %142 = vmatpush1.msra.mxu0 0.0
  %143 = vmatprep.subr.mxu0 0.0
  %144 = vmatpush1.msra.mxu0 0.0
  %145 = vmatprep.subr.mxu0 0.0
  %146 = vmatpush1.msra.mxu0 0.0
  %147 = vmatprep.subr.mxu0 0.0
  %148 = vmatpush1.msra.mxu0 0.0
  %149 = vmatprep.subr.mxu0 0.0
  %150 = vmatpush1.msra.mxu0 0.0
  %151 = vmatprep.subr.mxu0 0.0
  %152 = vmatpush1.msra.mxu0 0.0
  %153 = vmatprep.subr.mxu0 0.0
  %154 = vmatpush1.msra.mxu0 0.0
  %155 = vmatprep.subr.mxu0 0.0
  %156 = vmatpush1.msra.mxu0 0.0
  %157 = vmatprep.subr.mxu0 0.0
  %158 = vmatpush1.msra.mxu0 0.0
  %159 = vmatprep.subr.mxu0 0.0
  %160 = vmatpush1.msra.mxu0 0.0
  %161 = vmatprep.subr.mxu0 0.0
  %162 = vmatpush1.msra.mxu0 0.0
  %163 = vmatprep.subr.mxu0 0.0
  %164 = vmatpush1.msra.mxu0 0.0
  %165 = vmatprep.subr.mxu0 0.0
  %166 = vmatpush1.msra.mxu0 0.0
  %167 = vmatprep.subr.mxu0 0.0
  %168 = vmatpush1.msra.mxu0 0.0
  %169 = vmatprep.subr.mxu0 0.0
  %170 = vmatpush1.msra.mxu0 0.0
  %171 = vmatprep.subr.mxu0 0.0
  %172 = vmatpush1.msra.mxu0 0.0
  %173 = vmatprep.mubr.f32.mxu0 0.0
  %174 = vmatmul.mubr.f32.gmra.mrb[0].mxu0 %v86
  %v175 = vpop.f32.mrb[0].mxu0
  %v176 = vadd.f32 %v47, %v175
  %v177 = vpop.f32.mrb[0].mxu0
  %v178 = vadd.f32 %v47, %v177
  %179 = vmatprep.mubr.f32.mxu0 0.0
  %180 = vmatmul.mubr.f32.gmra.mrb[0].mxu0 %v89
  %v181 = vpop.f32.mrb[0].mxu0
  %v182 = vadd.f32 %v52, %v181
  %v183 = vpop.f32.mrb[0].mxu0
  %v184 = vadd.f32 %v52, %v183
  %185 = vmatprep.mubr.f32.mxu0 0.0
  %186 = vmatmul.mubr.f32.gmra.mrb[0].mxu0 %v92
  %v187 = vpop.f32.mrb[0].mxu0
  %v188 = vadd.f32 %v57, %v187
  %v189 = vpop.f32.mrb[0].mxu0
  %v190 = vadd.f32 %v57, %v189
  %191 = vmatprep.mubr.f32.mxu0 0.0
  %192 = vmatmul.mubr.f32.gmra.mrb[0].mxu0 %v95
  %v193 = vpop.f32.mrb[0].mxu0
  %v194 = vadd.f32 %v62, %v193
  %v195 = vpop.f32.mrb[0].mxu0
  %v196 = vadd.f32 %v62, %v195
  %197 = vmatprep.mubr.f32.mxu0 0.0
  %198 = vmatmul.mubr.f32.gmra.mrb[0].mxu0 %v98
  %v199 = vpop.f32.mrb[0].mxu0
  %v200 = vadd.f32 %v67, %v199
  %v201 = vpop.f32.mrb[0].mxu0
  %v202 = vadd.f32 %v67, %v201
  %203 = vmatprep.mubr.f32.mxu0 0.0
  %204 = vmatmul.mubr.f32.gmra.mrb[0].mxu0 %v101
  %v205 = vpop.f32.mrb[0].mxu0
  %v206 = vadd.f32 %v72, %v205
  %v207 = vpop.f32.mrb[0].mxu0
  %v208 = vadd.f32 %v72, %v207
  %209 = vmatprep.mubr.f32.mxu0 0.0
  %210 = vmatmul.mubr.f32.gmra.mrb[0].mxu0 %v104
  %v211 = vpop.f32.mrb[0].mxu0
  %v212 = vadd.f32 %v77, %v211
  %v213 = vpop.f32.mrb[0].mxu0
  %v214 = vadd.f32 %v77, %v213
  %215 = vmatprep.mubr.f32.mxu0 0.0
  %216 = vmatmul.mubr.f32.gmra.mrb[0].mxu0 %v107
  %v217 = vpop.f32.mrb[0].mxu0
  %v218 = vadd.f32 %v82, %v217
  %v219 = vpop.f32.mrb[0].mxu0
  %v220 = vadd.f32 %v82, %v219
  %221 = vdwg.mxu0
  %v222 = vxor.u32 %v176, 2147483648
  %v223 = vxor.u32 %v178, 2147483648
  %v224 = vxor.u32 %v182, 2147483648
  %v225 = vxor.u32 %v184, 2147483648
  %v226 = vxor.u32 %v188, 2147483648
  %v227 = vxor.u32 %v190, 2147483648
  %v228 = vxor.u32 %v194, 2147483648
  %v229 = vxor.u32 %v196, 2147483648
  %v230 = vxor.u32 %v200, 2147483648
  %v231 = vxor.u32 %v202, 2147483648
  %v232 = vxor.u32 %v206, 2147483648
  %v233 = vxor.u32 %v208, 2147483648
  %v234 = vxor.u32 %v212, 2147483648
  %v235 = vxor.u32 %v214, 2147483648
  %v236 = vxor.u32 %v218, 2147483648
  %v237 = vxor.u32 %v220, 2147483648
  %v238 = vmul.f32 %v222, 1.442695
  %v239 = vpow.pop %v238
  %v240 = vmul.f32 %v223, 1.442695
  %v241 = vpow.pop %v240
  %v242 = vmul.f32 %v224, 1.442695
  %v243 = vpow.pop %v242
  %v244 = vmul.f32 %v225, 1.442695
  %v245 = vpow.pop %v244
  %v246 = vmul.f32 %v226, 1.442695
  %v247 = vpow.pop %v246
  %v248 = vmul.f32 %v227, 1.442695
  %v249 = vpow.pop %v248
  %v250 = vmul.f32 %v228, 1.442695
  %v251 = vpow.pop %v250
  %v252 = vmul.f32 %v229, 1.442695
  %v253 = vpow.pop %v252
  %v254 = vmul.f32 %v230, 1.442695
  %v255 = vpow.pop %v254
  %v256 = vmul.f32 %v231, 1.442695
  %v257 = vpow.pop %v256
  %v258 = vmul.f32 %v232, 1.442695
  %v259 = vpow.pop %v258
  %v260 = vmul.f32 %v233, 1.442695
  %v261 = vpow.pop %v260
  %v262 = vmul.f32 %v234, 1.442695
  %v263 = vpow.pop %v262
  %v264 = vmul.f32 %v235, 1.442695
  %v265 = vpow.pop %v264
  %v266 = vmul.f32 %v236, 1.442695
  %v267 = vpow.pop %v266
  %v268 = vmul.f32 %v237, 1.442695
  %v269 = vpow.pop %v268
  %v270 = vadd.f32 %v239, 1.0
  %v271 = vadd.f32 %v241, 1.0
  %v272 = vadd.f32 %v243, 1.0
  %v273 = vadd.f32 %v245, 1.0
  %v274 = vadd.f32 %v247, 1.0
  %v275 = vadd.f32 %v249, 1.0
  %v276 = vadd.f32 %v251, 1.0
  %v277 = vadd.f32 %v253, 1.0
  %v278 = vadd.f32 %v255, 1.0
  %v279 = vadd.f32 %v257, 1.0
  %v280 = vadd.f32 %v259, 1.0
  %v281 = vadd.f32 %v261, 1.0
  %v282 = vadd.f32 %v263, 1.0
  %v283 = vadd.f32 %v265, 1.0
  %v284 = vadd.f32 %v267, 1.0
  %v285 = vadd.f32 %v269, 1.0
  %v286 = vrcp.pop %v270
  %v287 = vmul.f32 1.0, %v286
  %v288 = vrcp.pop %v271
  %v289 = vmul.f32 1.0, %v288
  %v290 = vrcp.pop %v272
  %v291 = vmul.f32 1.0, %v290
  %v292 = vrcp.pop %v273
  %v293 = vmul.f32 1.0, %v292
  %v294 = vrcp.pop %v274
  %v295 = vmul.f32 1.0, %v294
  %v296 = vrcp.pop %v275
  %v297 = vmul.f32 1.0, %v296
  %v298 = vrcp.pop %v276
  %v299 = vmul.f32 1.0, %v298
  %v300 = vrcp.pop %v277
  %v301 = vmul.f32 1.0, %v300
  %v302 = vrcp.pop %v278
  %v303 = vmul.f32 1.0, %v302
  %v304 = vrcp.pop %v279
  %v305 = vmul.f32 1.0, %v304
  %v306 = vrcp.pop %v280
  %v307 = vmul.f32 1.0, %v306
  %v308 = vrcp.pop %v281
  %v309 = vmul.f32 1.0, %v308
  %v310 = vrcp.pop %v282
  %v311 = vmul.f32 1.0, %v310
  %v312 = vrcp.pop %v283
  %v313 = vmul.f32 1.0, %v312
  %v314 = vrcp.pop %v284
  %v315 = vmul.f32 1.0, %v314
  %v316 = vrcp.pop %v285
  %v317 = vmul.f32 1.0, %v316
  %v318 = vmul.f32 %v176, %v287
  %v319 = vmul.f32 %v178, %v289
  %v320 = vmul.f32 %v182, %v291
  %v321 = vmul.f32 %v184, %v293
  %v322 = vmul.f32 %v188, %v295
  %v323 = vmul.f32 %v190, %v297
  %v324 = vmul.f32 %v194, %v299
  %v325 = vmul.f32 %v196, %v301
  %v326 = vmul.f32 %v200, %v303
  %v327 = vmul.f32 %v202, %v305
  %v328 = vmul.f32 %v206, %v307
  %v329 = vmul.f32 %v208, %v309
  %v330 = vmul.f32 %v212, %v311
  %v331 = vmul.f32 %v214, %v313
  %v332 = vmul.f32 %v218, %v315
  %v333 = vmul.f32 %v220, %v317
  %v334 = vld [vmem:[%s3] sm:$0xff]
  %v335 = vld [vmem:[%s4] sm:$0xff]
  %337 = vset.pattern.permute.xlu0 0
  %338 = vperm.xlu0 %337, %v335
  %v339 = vpop.permute.xlu0 %338
  %vm341 = vcmask 523264
  %v343 = vsel %vm341, %v334, 0
  %345 = vmatprep.subr.mxu0 %v319
  %346 = vmatpush1.msra.mxu0 %v318
  %347 = vmatprep.subr.mxu0 %v321
  %348 = vmatpush1.msra.mxu0 %v320
  %349 = vmatprep.subr.mxu0 %v323
  %350 = vmatpush1.msra.mxu0 %v322
  %351 = vmatprep.subr.mxu0 %v325
  %352 = vmatpush1.msra.mxu0 %v324
  %353 = vmatprep.subr.mxu0 %v327
  %354 = vmatpush1.msra.mxu0 %v326
  %355 = vmatprep.subr.mxu0 %v329
  %356 = vmatpush1.msra.mxu0 %v328
  %357 = vmatprep.subr.mxu0 %v331
  %358 = vmatpush1.msra.mxu0 %v330
  %359 = vmatprep.subr.mxu0 %v333
  %360 = vmatpush1.msra.mxu0 %v332
  %361 = vmatprep.subr.mxu0 0.0
  %362 = vmatpush1.msra.mxu0 0.0
  %363 = vmatprep.subr.mxu0 0.0
  %364 = vmatpush1.msra.mxu0 0.0
  %365 = vmatprep.subr.mxu0 0.0
  %366 = vmatpush1.msra.mxu0 0.0
  %367 = vmatprep.subr.mxu0 0.0
  %368 = vmatpush1.msra.mxu0 0.0
  %369 = vmatprep.subr.mxu0 0.0
  %370 = vmatpush1.msra.mxu0 0.0
  %371 = vmatprep.subr.mxu0 0.0
  %372 = vmatpush1.msra.mxu0 0.0
  %373 = vmatprep.subr.mxu0 0.0
  %374 = vmatpush1.msra.mxu0 0.0
  %375 = vmatprep.subr.mxu0 0.0
  %376 = vmatpush1.msra.mxu0 0.0
  %377 = vmatprep.subr.mxu0 0.0
  %378 = vmatpush1.msra.mxu0 0.0
  %379 = vmatprep.subr.mxu0 0.0
  %380 = vmatpush1.msra.mxu0 0.0
  %381 = vmatprep.subr.mxu0 0.0
  %382 = vmatpush1.msra.mxu0 0.0
  %383 = vmatprep.subr.mxu0 0.0
  %384 = vmatpush1.msra.mxu0 0.0
  %385 = vmatprep.subr.mxu0 0.0
  %386 = vmatpush1.msra.mxu0 0.0
  %387 = vmatprep.subr.mxu0 0.0
  %388 = vmatpush1.msra.mxu0 0.0
  %389 = vmatprep.subr.mxu0 0.0
  %390 = vmatpush1.msra.mxu0 0.0
  %391 = vmatprep.subr.mxu0 0.0
  %392 = vmatpush1.msra.mxu0 0.0
  %393 = vmatprep.subr.mxu0 0.0
  %394 = vmatpush1.msra.mxu0 0.0
  %395 = vmatprep.subr.mxu0 0.0
  %396 = vmatpush1.msra.mxu0 0.0
  %397 = vmatprep.subr.mxu0 0.0
  %398 = vmatpush1.msra.mxu0 0.0
  %399 = vmatprep.subr.mxu0 0.0
  %400 = vmatpush1.msra.mxu0 0.0
  %401 = vmatprep.subr.mxu0 0.0
  %402 = vmatpush1.msra.mxu0 0.0
  %403 = vmatprep.subr.mxu0 0.0
  %404 = vmatpush1.msra.mxu0 0.0
  %405 = vmatprep.subr.mxu0 0.0
  %406 = vmatpush1.msra.mxu0 0.0
  %407 = vmatprep.subr.mxu0 0.0
  %408 = vmatpush1.msra.mxu0 0.0
  %409 = vmatprep.mubr.f32.mxu0 0.0
  %410 = vmatmul.mubr.f32.gmra.mrb[0].mxu0 %v343
  %v411 = vpop.f32.mrb[0].mxu0
  %v412 = vadd.f32 %v339, %v411
  %v413 = vpop.f32.mrb[0].mxu0
  %v414 = vadd.f32 %v339, %v413
  %415 = vdwg.mxu0
  %v416 = vld [vmem:[%s5] sm:$0xff]
  %418 = vset.pattern.permute.xlu0 0
  %419 = vperm.xlu0 %418, %v416
  %v420 = vpop.permute.xlu0 %419
  %v422 = vmul.f32 %v420, %v26
  %v423 = vmul.f32 %v420, %v27
  %v424 = vld [vmem:[%s6] sm:$0xff]
  %426 = vset.pattern.permute.xlu0 0
  %427 = vperm.xlu0 %426, %v424
  %v428 = vpop.permute.xlu0 %427
  %v430 = vmul.f32 %v428, %v412
  %v431 = vmul.f32 %v428, %v414
  %v432 = vadd.f32 %v422, %v430
  %v433 = vadd.f32 %v423, %v431
  %434 = vst [vmem:[%s7] sm:$0xff] %v432
  %435 = vst [vmem:[%s7 + $0x8] sm:$0xff] %v433
  // Predicated region
  $region30: #{consistency_model_forward.1} parent=0 // pred_check
    _
  $region31: #{consistency_model_forward.1} parent=0 // pred_check_branch
    %437 = sbr.rel (0) target = $region33
  $region32: #{consistency_model_forward.1} parent=0 // pred_region
    _
  $region33: #{consistency_model_forward.1} parent=0 // pred_fallthru
    _
  // Predicated region
  $region34: #{consistency_model_forward.1} parent=0 // pred_check
    _
  $region35: #{consistency_model_forward.1} parent=0 // pred_check_branch
    %439 = sbr.rel (0) target = $region37
  $region36: #{consistency_model_forward.1} parent=0 // pred_region
    _
  $region37: #{consistency_model_forward.1} parent=0 // pred_fallthru
    _

</llo_original>
